<compile_context>
chip_gen: v6e
topology: v6e:2x2x1
jax: 0.10.0
libtpu: 0.0.40
codegen_flags: <defaults>
</compile_context>

<pallas_src>
import jax
import jax.numpy as jnp
from jax import lax
from jax.experimental import pallas as pl
from jax.experimental.pallas import tpu as pltpu

EPS = 1e-5


def _layernorm_f32(x_ref, gamma_ref, beta_ref):
    # LayerNorm in f32 (biased variance, eps inside rsqrt -> matches torch.nn.LayerNorm).
    x = x_ref[...].astype(jnp.float32)
    mean = jnp.mean(x, axis=-1, keepdims=True)
    xc = x - mean
    var = jnp.mean(xc * xc, axis=-1, keepdims=True)
    inv = lax.rsqrt(var + EPS)
    return xc * inv * gamma_ref[...].astype(jnp.float32) + beta_ref[...].astype(jnp.float32)


def _resident_w_kernel(x_ref, gamma_ref, beta_ref, w_ref, b_ref, o_ref):
    # x_ref: (tm, H) rows; w_ref: (H, H) resident weight in (K, N) layout; o_ref: (tm, H).
    xn = _layernorm_f32(x_ref, gamma_ref, beta_ref).astype(x_ref.dtype)
    y = jnp.dot(xn, w_ref[...], preferred_element_type=jnp.float32)
    o_ref[...] = (y + b_ref[...].astype(jnp.float32)).astype(o_ref.dtype)


def _column_slab_kernel(x_ref, gamma_ref, beta_ref, w_ref, b_ref, o_ref, xn_ref):
    # x_ref: (tm, H) rows (resident over j); w_ref: (H, tn) weight column slab;
    # o_ref: (tm, tn); xn_ref: (tm, H) scratch holding the normalized rows (MXU dtype).
    # LN is computed once per row block at j == 0; the j axis is "arbitrary" (never the
    # megacore-split axis), so every core sees j == 0 for its own row blocks.
    @pl.when(pl.program_id(1) == 0)
    def _():
        xn_ref[...] = _layernorm_f32(x_ref, gamma_ref, beta_ref).astype(xn_ref.dtype)

    y = jnp.dot(xn_ref[...], w_ref[...], preferred_element_type=jnp.float32)
    o_ref[...] = (y + b_ref[...].astype(jnp.float32)).astype(o_ref.dtype)


def _pick_row_tile(M, cap=512):
    # Full block for small M; otherwise the largest multiple-of-8 divisor <= cap so we
    # never blow the VMEM budget with tm == M on large, non-divisible row counts.
    if M <= cap:
        return M
    for cand in range(cap, 7, -8):
        if M % cand == 0:
            return cand
    # TODO(synk): pad M to a multiple of 8 and mask the tail for ragged row counts.
    return M


def _pick_col_tile(H, cap=512):
    if H <= cap:
        return H
    for cand in (cap, 384, 256, 128):
        if H % cand == 0:
            return cand
    # TODO(synk): no padding path when H is not a multiple of 128.
    return H


def _vmem_estimate_slab(tm, tn, H, xb, wb):
    return (2 * tm * H * xb      # x row blocks (double-buffered)
            + tm * H * xb        # xn scratch
            + 2 * H * tn * wb    # weight column slabs (double-buffered)
            + 2 * tm * tn * xb   # output tiles
            + 8 * H * 4)         # gamma / beta / bias


def transformer_block(x, ln_gamma, ln_beta, lin_w, lin_b, *,
                      tm=None, tn=None, w_resident_cap_bytes=8 << 20):
    """Fused LayerNorm -> Linear.

    x: [B, S, H]; ln_gamma/ln_beta: [H]; lin_w: [H, H] in torch layout (out, in); lin_b: [H].
    """
    B, S, H = x.shape
    M = B * S
    x2d = x.reshape(M, H)

    # Torch stores Linear weights as (out, in).  Transpose once to the canonical (K, N)
    # contraction layout and cast to the activation dtype so the MXU sees matched operands
    # (in a real module this is a one-time, init-time cost; under jit it folds away).
    w_kn = lin_w.T.astype(x.dtype)

    gamma2d = ln_gamma.reshape(1, H)
    beta2d = ln_beta.reshape(1, H)
    b2d = lin_b.reshape(1, H)

    xb = jnp.dtype(x.dtype).itemsize
    wb = jnp.dtype(w_kn.dtype).itemsize

    if tm is None:
        tm = _pick_row_tile(M)
    assert M % tm == 0

    use_resident = (tn is None) and (H * H * wb <= w_resident_cap_bytes)

    if use_resident:
        # ---- Path A: whole weight resident in VMEM, single grid axis over row blocks ----
        vmem_est = (2 * tm * H * xb      # x row blocks
                    + 2 * H * H * wb     # resident weight (budget the double buffer)
                    + 2 * tm * H * xb    # output tiles
                    + 8 * H * 4)         # gamma / beta / bias
        vmem_limit = int(min(max(int(vmem_est * 1.5) + (2 << 20), 32 << 20), 64 << 20))

        cost = pl.CostEstimate(
            flops=2 * M * H * H + 10 * M * H,
            transcendentals=M,
            bytes_accessed=2 * M * H * xb + H * H * wb + 4 * H * 4,
        )

        out2d = pl.pallas_call(
            _resident_w_kernel,
            out_shape=jax.ShapeDtypeStruct((M, H), x.dtype),
            grid_spec=pltpu.PrefetchScalarGridSpec(
                num_scalar_prefetch=0,
                grid=(M // tm,),
                in_specs=[
                    pl.BlockSpec((tm, H), lambda i: (i, 0)),   # x rows
                    pl.BlockSpec((1, H), lambda i: (0, 0)),    # LN gamma
                    pl.BlockSpec((1, H), lambda i: (0, 0)),    # LN beta
                    pl.BlockSpec((H, H), lambda i: (0, 0)),    # resident weight, DMA'd once
                    pl.BlockSpec((1, H), lambda i: (0, 0)),    # bias
                ],
                out_specs=pl.BlockSpec((tm, H), lambda i: (i, 0)),
            ),
            compiler_params=pltpu.CompilerParams(
                dimension_semantics=("parallel",),
                vmem_limit_bytes=vmem_limit),
            cost_estimate=cost,
        )(x2d, gamma2d, beta2d, w_kn, b2d)
        return out2d.reshape(B, S, H)

    # ---- Path B: weight streamed as (H, tn) column slabs; K axis fully reduced per dot ----
    if tn is None:
        tn = _pick_col_tile(H)
    assert H % tn == 0

    budget = 56 << 20  # v7x-safe (64 MiB physical, leave headroom for Mosaic scratch)
    while _vmem_estimate_slab(tm, tn, H, xb, wb) > budget and tm > 128:
        new_tm = _pick_row_tile(M, cap=max(128, tm // 2))
        if new_tm >= tm:
            break
        tm = new_tm
    assert M % tm == 0

    vmem_est = _vmem_estimate_slab(tm, tn, H, xb, wb)
    vmem_limit = int(min(max(int(vmem_est * 1.5) + (2 << 20), 32 << 20), 64 << 20))

    cost = pl.CostEstimate(
        flops=2 * M * H * H + 10 * M * H,
        transcendentals=M,
        # x read + output write + weight re-streamed once per row block + LN/bias params.
        bytes_accessed=2 * M * H * xb + (M // tm) * H * H * wb + 4 * H * 4,
    )

    out2d = pl.pallas_call(
        _column_slab_kernel,
        out_shape=jax.ShapeDtypeStruct((M, H), x.dtype),
        grid_spec=pltpu.PrefetchScalarGridSpec(
            num_scalar_prefetch=0,
            grid=(M // tm, H // tn),
            in_specs=[
                pl.BlockSpec((tm, H), lambda i, j: (i, 0)),    # x rows (resident over j)
                pl.BlockSpec((1, H), lambda i, j: (0, 0)),     # LN gamma
                pl.BlockSpec((1, H), lambda i, j: (0, 0)),     # LN beta
                pl.BlockSpec((H, tn), lambda i, j: (0, j)),    # weight column slab (K, tn)
                pl.BlockSpec((1, tn), lambda i, j: (0, j)),    # bias tile
            ],
            out_specs=pl.BlockSpec((tm, tn), lambda i, j: (i, j)),
            scratch_shapes=[
                pltpu.VMEM((tm, H), x.dtype),   # normalized rows (MXU operand dtype)
            ],
        ),
        compiler_params=pltpu.CompilerParams(
            # Row axis i is the megacore-split axis; j stays "arbitrary" so the LN hoist
            # at j == 0 is valid per core and x blocks are not re-DMA'd by both cores.
            dimension_semantics=("parallel", "arbitrary"),
            vmem_limit_bytes=vmem_limit),
        cost_estimate=cost,
    )(x2d, gamma2d, beta2d, w_kn, b2d)
    return out2d.reshape(B, S, H)


def _reference(x, ln_gamma, ln_beta, lin_w, lin_b):
    xf = x.astype(jnp.float32)
    mean = jnp.mean(xf, axis=-1, keepdims=True)
    var = jnp.mean((xf - mean) ** 2, axis=-1, keepdims=True)
    xn = (xf - mean) * lax.rsqrt(var + EPS) * ln_gamma + ln_beta
    y = jnp.dot(xn, lin_w.T.astype(jnp.float32), precision=lax.Precision.HIGHEST) + lin_b
    return y.astype(x.dtype)


if __name__ == "__main__":
    # Shapes implied by the module: [batch, seq, hidden] with hidden_size = 512.
    B, S, H = 2, 8, 512
    key = jax.random.PRNGKey(0)
    kx, kw, kb = jax.random.split(key, 3)

    x = jax.random.normal(kx, (B, S, H), dtype=jnp.float32)

    # nn.Linear-style init scale; LayerNorm affine = (ones, zeros) like torch defaults.
    bound = 1.0 / (H ** 0.5)
    lin_w = jax.random.uniform(kw, (H, H), minval=-bound, maxval=bound, dtype=jnp.float32)
    lin_b = jax.random.uniform(kb, (H,), minval=-bound, maxval=bound, dtype=jnp.float32)
    ln_gamma = jnp.ones((H,), dtype=jnp.float32)
    ln_beta = jnp.zeros((H,), dtype=jnp.float32)

    ref = _reference(x, ln_gamma, ln_beta, lin_w, lin_b)

    # Path A: resident-weight, single grid axis (the default for H = 512).
    out_a = jax.block_until_ready(transformer_block(x, ln_gamma, ln_beta, lin_w, lin_b))
    assert out_a.shape == (B, S, H)
    err_a = float(jnp.max(jnp.abs(out_a - ref)))
    assert jnp.allclose(out_a, ref, atol=2e-3, rtol=2e-3), err_a

    # Path B sanity check: force the column-slab path (tn=128) to exercise the LN hoist.
    out_b = jax.block_until_ready(
        transformer_block(x, ln_gamma, ln_beta, lin_w, lin_b, tn=128))
    err_b = float(jnp.max(jnp.abs(out_b - ref)))
    assert jnp.allclose(out_b, ref, atol=2e-3, rtol=2e-3), err_b

    print("KERNEL_OK")
</pallas_src>

<mosaic_0001>
module attributes {stable_mosaic.version = 11 : i64} {
  func.func @_resident_w_kernel(%arg0: i32, %arg1: memref<16x512xf32, #tpu.memory_space<vmem>>, %arg2: memref<1x512xf32, #tpu.memory_space<vmem>>, %arg3: memref<1x512xf32, #tpu.memory_space<vmem>>, %arg4: memref<512x512xf32, #tpu.memory_space<vmem>>, %arg5: memref<1x512xf32, #tpu.memory_space<vmem>>, %arg6: memref<16x512xf32, #tpu.memory_space<vmem>>) attributes {dimension_semantics = [#tpu.dimension_semantics<parallel>], iteration_bounds = array<i64: 1>, scalar_prefetch = 0 : i64, scratch_operands = 0 : i64, tpu.core_type = #tpu.core_type<tc>, window_params = [{transform_indices = @transform_0, window_bounds = array<i64: 16, 512>}, {pipeline_mode = #tpu.pipeline_mode<synchronous>, transform_indices = @transform_1, window_bounds = array<i64: 1, 512>}, {pipeline_mode = #tpu.pipeline_mode<synchronous>, transform_indices = @transform_2, window_bounds = array<i64: 1, 512>}, {pipeline_mode = #tpu.pipeline_mode<synchronous>, transform_indices = @transform_3, window_bounds = array<i64: 512, 512>}, {pipeline_mode = #tpu.pipeline_mode<synchronous>, transform_indices = @transform_4, window_bounds = array<i64: 1, 512>}, {transform_indices = @transform_5, window_bounds = array<i64: 16, 512>}]} {
    %c0 = arith.constant 0 : index
    %c0_0 = arith.constant 0 : index
    %0 = vector.load %arg1[%c0, %c0_0] : memref<16x512xf32, #tpu.memory_space<vmem>>, vector<16x512xf32>
    %cst = arith.constant dense<0.000000e+00> : vector<16xf32>
    %1 = vector.multi_reduction <add>, %0, %cst [1] : vector<16x512xf32> to vector<16xf32>
    %2 = vector.shape_cast %1 : vector<16xf32> to vector<16x1xf32>
    %cst_1 = arith.constant 5.120000e+02 : f32
    %3 = vector.broadcast %cst_1 : f32 to vector<16x1xf32>
    %4 = arith.divf %2, %3 : vector<16x1xf32>
    %5 = vector.broadcast %4 : vector<16x1xf32> to vector<16x512xf32>
    %6 = arith.subf %0, %5 : vector<16x512xf32>
    %7 = arith.mulf %6, %6 : vector<16x512xf32>
    %cst_2 = arith.constant dense<0.000000e+00> : vector<16xf32>
    %8 = vector.multi_reduction <add>, %7, %cst_2 [1] : vector<16x512xf32> to vector<16xf32>
    %9 = vector.shape_cast %8 : vector<16xf32> to vector<16x1xf32>
    %cst_3 = arith.constant 5.120000e+02 : f32
    %10 = vector.broadcast %cst_3 : f32 to vector<16x1xf32>
    %11 = arith.divf %9, %10 : vector<16x1xf32>
    %cst_4 = arith.constant 9.99999974E-6 : f32
    %12 = vector.broadcast %cst_4 : f32 to vector<16x1xf32>
    %13 = arith.addf %11, %12 : vector<16x1xf32>
    %14 = math.rsqrt %13 : vector<16x1xf32>
    %15 = vector.broadcast %14 : vector<16x1xf32> to vector<16x512xf32>
    %16 = arith.mulf %6, %15 : vector<16x512xf32>
    %c0_5 = arith.constant 0 : index
    %c0_6 = arith.constant 0 : index
    %17 = vector.load %arg2[%c0_5, %c0_6] : memref<1x512xf32, #tpu.memory_space<vmem>>, vector<1x512xf32>
    %18 = vector.broadcast %17 : vector<1x512xf32> to vector<16x512xf32>
    %19 = arith.mulf %16, %18 : vector<16x512xf32>
    %c0_7 = arith.constant 0 : index
    %c0_8 = arith.constant 0 : index
    %20 = vector.load %arg3[%c0_7, %c0_8] : memref<1x512xf32, #tpu.memory_space<vmem>>, vector<1x512xf32>
    %21 = vector.broadcast %20 : vector<1x512xf32> to vector<16x512xf32>
    %22 = arith.addf %19, %21 : vector<16x512xf32>
    %c0_9 = arith.constant 0 : index
    %c0_10 = arith.constant 0 : index
    %23 = vector.load %arg4[%c0_9, %c0_10] : memref<512x512xf32, #tpu.memory_space<vmem>>, vector<512x512xf32>
    %cst_11 = arith.constant dense<0.000000e+00> : vector<16x512xf32>
    %24 = tpu.matmul %22, %23, %cst_11 {dimension_numbers = #tpu.dot_dimension_numbers<[1], [0], [0], [1], [0, 0, 1, 1], [], []>} : vector<16x512xf32>, vector<512x512xf32>, vector<16x512xf32> -> vector<16x512xf32>
    %c0_12 = arith.constant 0 : index
    %c0_13 = arith.constant 0 : index
    %25 = vector.load %arg5[%c0_12, %c0_13] : memref<1x512xf32, #tpu.memory_space<vmem>>, vector<1x512xf32>
    %26 = vector.broadcast %25 : vector<1x512xf32> to vector<16x512xf32>
    %27 = arith.addf %24, %26 : vector<16x512xf32>
    %c0_14 = arith.constant 0 : index
    %c0_15 = arith.constant 0 : index
    %28 = vector.load %arg6[%c0_14, %c0_15] : memref<16x512xf32, #tpu.memory_space<vmem>>, vector<16x512xf32>
    tpu.vector_store %arg6[%c0_14, %c0_15], %27 {strides = array<i32>} : memref<16x512xf32, #tpu.memory_space<vmem>>, vector<16x512xf32>,
    return
  }
  func.func @transform_0(%arg0: i32) -> (i32, i32) {
    %c0_i32 = arith.constant 0 : i32
    %c0_i32_0 = arith.constant 0 : i32
    return %arg0, %c0_i32 : i32, i32
  }
  func.func @transform_1(%arg0: i32) -> (i32, i32) {
    %c0_i32 = arith.constant 0 : i32
    %c0_i32_0 = arith.constant 0 : i32
    %c0_i32_1 = arith.constant 0 : i32
    return %c0_i32, %c0_i32_0 : i32, i32
  }
  func.func @transform_2(%arg0: i32) -> (i32, i32) {
    %c0_i32 = arith.constant 0 : i32
    %c0_i32_0 = arith.constant 0 : i32
    %c0_i32_1 = arith.constant 0 : i32
    return %c0_i32, %c0_i32_0 : i32, i32
  }
  func.func @transform_3(%arg0: i32) -> (i32, i32) {
    %c0_i32 = arith.constant 0 : i32
    %c0_i32_0 = arith.constant 0 : i32
    %c0_i32_1 = arith.constant 0 : i32
    return %c0_i32, %c0_i32_0 : i32, i32
  }
  func.func @transform_4(%arg0: i32) -> (i32, i32) {
    %c0_i32 = arith.constant 0 : i32
    %c0_i32_0 = arith.constant 0 : i32
    %c0_i32_1 = arith.constant 0 : i32
    return %c0_i32, %c0_i32_0 : i32, i32
  }
  func.func @transform_5(%arg0: i32) -> (i32, i32) {
    %c0_i32 = arith.constant 0 : i32
    %c0_i32_0 = arith.constant 0 : i32
    return %arg0, %c0_i32 : i32, i32
  }
}

</mosaic_0001>

<llo_original>
// kernel: tpu_custom_call.1
$region0: #{tpu_custom_call.1}
  #allocation0 [shape = 'u32[]', space=smem, size = 0x4, offset = 0x4, fixed_abs, tag = 'smem constant byte address 0x4 - core index']
  #allocation1 [shape = 'u32[144,128]{1,0:T(1,128)}', space=vmem, size = 0x12000, scoped, tag = 'internal scratch']
  %s0 = inlined_call_operand.hbm [shape: f32[16,512], index: 0, kind: input, shape index: {}]
  %s1 = inlined_call_operand.hbm [shape: f32[1,512], index: 1, kind: input, shape index: {}]
  %s2 = inlined_call_operand.hbm [shape: f32[1,512], index: 2, kind: input, shape index: {}]
  %s3 = inlined_call_operand.hbm [shape: f32[512,512], index: 3, kind: input, shape index: {}]
  %s4 = inlined_call_operand.vmem [shape: f32[1,512], index: 4, kind: input, shape index: {}]
  %s5 = inlined_call_operand.hbm [shape: f32[16,512], index: 5, kind: output, shape index: {}]
  %s6 = sld [smem:[#allocation0]]
  $region46: #{tpu_custom_call.1} parent=0
    _
  %s8 = ssub.s32 1, %s6
  %s9 = scalar_select 0, %s8, %s6
  $region1: #{tpu_custom_call.1} parent=0
    #allocation2 [shape = 'u8[32768]{0}', space=vmem, size = 0x8000, scoped, tag = 'input window, operand 0, single buffered']
    #allocation3 [shape = 's32[1]{0}', space=sflag, size = 0x4, scoped, tag = 'scoped memory for tpu_custom_call.1']
    #allocation4 [shape = 's32[1]{0}', space=sflag, size = 0x4, scoped, tag = 'scoped memory for tpu_custom_call.1']
    #allocation5 [shape = 'u8[2048]{0}', space=vmem, size = 0x800, scoped, tag = 'input window, operand 1, single buffered']
    #allocation6 [shape = 's32[1]{0}', space=sflag, size = 0x4, scoped, tag = 'scoped memory for tpu_custom_call.1']
    #allocation7 [shape = 'u8[2048]{0}', space=vmem, size = 0x800, scoped, tag = 'input window, operand 2, single buffered']
    #allocation8 [shape = 'u8[1048576]{0}', space=vmem, size = 0x100000, scoped, tag = 'input window, operand 3, single buffered']
    #allocation9 [shape = 's32[1]{0}', space=sflag, size = 0x4, scoped, tag = 'scoped memory for tpu_custom_call.1']
    #allocation10 [shape = 'u8[32768]{0}', space=vmem, size = 0x8000, scoped, tag = 'output window, operand 0, single buffered']
    %10 = vsyncpa [#allocation3], 0
    %11 = vsyncpa [#allocation6], 0
    %12 = vsyncpa [#allocation9], 0
    %13 = vsyncpa [#allocation4], 0
    // Predicated region
    $region2: #{tpu_custom_call.1} parent=1 // pred_check
      _
    $region3: #{tpu_custom_call.1} parent=1 // pred_check_branch
      %15 = sbr.rel (0) target = $region5
    $region4: #{tpu_custom_call.1} parent=1 // pred_region
      %s17 = ssub.s32 1024, 1024
      %18 = vsyncadd [#allocation3], %s17
      %s19 = sshll.u32 [#allocation2], 4
      %s20 = int_to_ptr.vmem [resolvable:$true] %s19
      %25 = dma.hbm_to_vmem [thread:$0]  %s0, 1024, %s20, [#allocation3], 512, 512, 32
    $region5: #{tpu_custom_call.1} parent=1 // pred_fallthru
      _
    // Predicated region
    $region6: #{tpu_custom_call.1} parent=1 // pred_check
      _
    $region7: #{tpu_custom_call.1} parent=1 // pred_check_branch
      %27 = sbr.rel (0) target = $region9
    $region8: #{tpu_custom_call.1} parent=1 // pred_region
      %s29 = ssub.s32 64, 64
      %30 = vsyncadd [#allocation6], %s29
      %s32 = sshll.u32 [#allocation5], 4
      %s33 = int_to_ptr.vmem [resolvable:$true] %s32
      %35 = dma.hbm_to_vmem [thread:$0]  %s1, 64, %s33, [#allocation6]
    $region9: #{tpu_custom_call.1} parent=1 // pred_fallthru
      _
    // Predicated region
    $region10: #{tpu_custom_call.1} parent=1 // pred_check
      _
    $region11: #{tpu_custom_call.1} parent=1 // pred_check_branch
      %37 = sbr.rel (0) target = $region13
    $region12: #{tpu_custom_call.1} parent=1 // pred_region
      %s39 = ssub.s32 64, 64
      %40 = vsyncadd [#allocation6], %s39
      %s42 = sshll.u32 [#allocation7], 4
      %s43 = int_to_ptr.vmem [resolvable:$true] %s42
      %45 = dma.hbm_to_vmem [thread:$0]  %s2, 64, %s43, [#allocation6]
    $region13: #{tpu_custom_call.1} parent=1 // pred_fallthru
      _
    // Predicated region
    $region14: #{tpu_custom_call.1} parent=1 // pred_check
      _
    $region15: #{tpu_custom_call.1} parent=1 // pred_check_branch
      %47 = sbr.rel (0) target = $region17
    $region16: #{tpu_custom_call.1} parent=1 // pred_region
      %s49 = ssub.s32 32768, 32768
      %50 = vsyncadd [#allocation9], %s49
      %s51 = sshll.u32 [#allocation8], 4
      %s52 = int_to_ptr.vmem [resolvable:$true] %s51
      %57 = dma.hbm_to_vmem [thread:$0]  %s3, 32768, %s52, [#allocation9], 512, 512, 32
    $region17: #{tpu_custom_call.1} parent=1 // pred_fallthru
      _
    // Predicated region
    $region18: #{tpu_custom_call.1} parent=1 // pred_check
      _
    $region19: #{tpu_custom_call.1} parent=1 // pred_check_branch
      %59 = sbr.rel (0) target = $region21
    $region20: #{tpu_custom_call.1} parent=1 // pred_region
      _
    $region21: #{tpu_custom_call.1} parent=1 // pred_fallthru
      _
    // Predicated region
    $region22: #{tpu_custom_call.1} parent=1 // pred_check
      _
    $region23: #{tpu_custom_call.1} parent=1 // pred_check_branch
      %61 = sbr.rel (0) target = $region25
    $region24: #{tpu_custom_call.1} parent=1 // pred_region
      %62 = dma.done [#allocation3], 1024
    $region25: #{tpu_custom_call.1} parent=1 // pred_fallthru
      _
    // Predicated region
    $region26: #{tpu_custom_call.1} parent=1 // pred_check
      _
    $region27: #{tpu_custom_call.1} parent=1 // pred_check_branch
      %64 = sbr.rel (0) target = $region29
    $region28: #{tpu_custom_call.1} parent=1 // pred_region
      %65 = dma.done [#allocation6], 64
    $region29: #{tpu_custom_call.1} parent=1 // pred_fallthru
      _
    // Predicated region
    $region30: #{tpu_custom_call.1} parent=1 // pred_check
      _
    $region31: #{tpu_custom_call.1} parent=1 // pred_check_branch
      %67 = sbr.rel (0) target = $region33
    $region32: #{tpu_custom_call.1} parent=1 // pred_region
      %68 = dma.done [#allocation6], 64
    $region33: #{tpu_custom_call.1} parent=1 // pred_fallthru
      _
    // Predicated region
    $region34: #{tpu_custom_call.1} parent=1 // pred_check
      _
    $region35: #{tpu_custom_call.1} parent=1 // pred_check_branch
      %70 = sbr.rel (0) target = $region37
    $region36: #{tpu_custom_call.1} parent=1 // pred_region
      %71 = dma.done [#allocation9], 32768
    $region37: #{tpu_custom_call.1} parent=1 // pred_fallthru
      _
    %v72 = vld [vmem:[#allocation2] sm:$0xff]
    %v73 = vld [vmem:[#allocation2 + $0x8] sm:$0xff]
    %v74 = vld [vmem:[#allocation2 + $0x10] sm:$0xff]
    %v75 = vld [vmem:[#allocation2 + $0x18] sm:$0xff]
    %v76 = vld [vmem:[#allocation2 + $0x20] sm:$0xff]
    %v77 = vld [vmem:[#allocation2 + $0x28] sm:$0xff]
    %v78 = vld [vmem:[#allocation2 + $0x30] sm:$0xff]
    %v79 = vld [vmem:[#allocation2 + $0x38] sm:$0xff]
    %v80 = vadd.f32 %v72, %v73
    %v81 = vadd.f32 %v80, %v74
    %v82 = vadd.f32 %v81, %v75
    %83 = vadd.xlane.f32.xlu0 %v82
    %v84 = vpop.xlane.xlu0 %83
    %v85 = vadd.f32 %v76, %v77
    %v86 = vadd.f32 %v85, %v78
    %v87 = vadd.f32 %v86, %v79
    %88 = vadd.xlane.f32.xlu0 %v87
    %v89 = vpop.xlane.xlu0 %88
    %v90 = vrcp.pop 512.0
    %v91 = vmul.f32 %v84, %v90
    %v92 = vmul.f32 %v89, %v90
    %v93 = vsub.f32 %v72, %v91
    %v94 = vsub.f32 %v73, %v91
    %v95 = vsub.f32 %v74, %v91
    %v96 = vsub.f32 %v75, %v91
    %v97 = vsub.f32 %v76, %v92
    %v98 = vsub.f32 %v77, %v92
    %v99 = vsub.f32 %v78, %v92
    %v100 = vsub.f32 %v79, %v92
    %v101 = vmul.f32 %v93, %v93
    %v102 = vmul.f32 %v94, %v94
    %v103 = vmul.f32 %v95, %v95
    %v104 = vmul.f32 %v96, %v96
    %v105 = vmul.f32 %v97, %v97
    %v106 = vmul.f32 %v98, %v98
    %v107 = vmul.f32 %v99, %v99
    %v108 = vmul.f32 %v100, %v100
    %v109 = vadd.f32 %v101, %v102
    %v110 = vadd.f32 %v109, %v103
    %v111 = vadd.f32 %v110, %v104
    %112 = vadd.xlane.f32.xlu0 %v111
    %v113 = vpop.xlane.xlu0 %112
    %v114 = vadd.f32 %v105, %v106
    %v115 = vadd.f32 %v114, %v107
    %v116 = vadd.f32 %v115, %v108
    %117 = vadd.xlane.f32.xlu0 %v116
    %v118 = vpop.xlane.xlu0 %117
    %v119 = vmul.f32 %v113, %v90
    %v120 = vmul.f32 %v118, %v90
    %v121 = vadd.f32 %v119, 1e-05
    %v122 = vadd.f32 %v120, 1e-05
    %v123 = vrsqrt.pop %v121
    %v124 = vrsqrt.pop %v122
    %v125 = vmul.f32 %v93, %v123
    %v126 = vmul.f32 %v94, %v123
    %v127 = vmul.f32 %v95, %v123
    %v128 = vmul.f32 %v96, %v123
    %v129 = vmul.f32 %v97, %v124
    %v130 = vmul.f32 %v98, %v124
    %v131 = vmul.f32 %v99, %v124
    %v132 = vmul.f32 %v100, %v124
    %v133 = vld [vmem:[#allocation5] sm:$0xf]
    %v135 = vlaneseq
    %v136 = vshrl.u32 %v135, 7
    %v137 = vsub.s32 0, %v136
    %v138 = vrot.slane %v133, %v137
    %v139 = vlaneseq
    %v140 = vshrl.u32 %v139, 7
    %v141 = vsub.s32 1, %v140
    %v142 = vrot.slane %v133, %v141
    %v143 = vlaneseq
    %v144 = vshrl.u32 %v143, 7
    %v145 = vsub.s32 2, %v144
    %v146 = vrot.slane %v133, %v145
    %v147 = vlaneseq
    %v148 = vshrl.u32 %v147, 7
    %v149 = vsub.s32 3, %v148
    %v150 = vrot.slane %v133, %v149
    %v155 = vmul.f32 %v125, %v138
    %v156 = vmul.f32 %v126, %v142
    %v157 = vmul.f32 %v127, %v146
    %v158 = vmul.f32 %v128, %v150
    %v159 = vmul.f32 %v129, %v138
    %v160 = vmul.f32 %v130, %v142
    %v161 = vmul.f32 %v131, %v146
    %v162 = vmul.f32 %v132, %v150
    %v163 = vld [vmem:[#allocation7] sm:$0xf]
    %v165 = vlaneseq
    %v166 = vshrl.u32 %v165, 7
    %v167 = vsub.s32 0, %v166
    %v168 = vrot.slane %v163, %v167
    %v169 = vlaneseq
    %v170 = vshrl.u32 %v169, 7
    %v171 = vsub.s32 1, %v170
    %v172 = vrot.slane %v163, %v171
    %v173 = vlaneseq
    %v174 = vshrl.u32 %v173, 7
    %v175 = vsub.s32 2, %v174
    %v176 = vrot.slane %v163, %v175
    %v177 = vlaneseq
    %v178 = vshrl.u32 %v177, 7
    %v179 = vsub.s32 3, %v178
    %v180 = vrot.slane %v163, %v179
    %v185 = vadd.f32 %v155, %v168
    %v186 = vadd.f32 %v156, %v172
    %v187 = vadd.f32 %v157, %v176
    %v188 = vadd.f32 %v158, %v180
    %v189 = vadd.f32 %v159, %v168
    %v190 = vadd.f32 %v160, %v172
    %v191 = vadd.f32 %v161, %v176
    %v192 = vadd.f32 %v162, %v180
    %v193 = vld [vmem:[#allocation8] sm:$0xff]
    %v194 = vld [vmem:[#allocation8 + $0x8] sm:$0xff]
    %v195 = vld [vmem:[#allocation8 + $0x10] sm:$0xff]
    %v196 = vld [vmem:[#allocation8 + $0x18] sm:$0xff]
    %v197 = vld [vmem:[#allocation8 + $0x20] sm:$0xff]
    %v198 = vld [vmem:[#allocation8 + $0x28] sm:$0xff]
    %v199 = vld [vmem:[#allocation8 + $0x30] sm:$0xff]
    %v200 = vld [vmem:[#allocation8 + $0x38] sm:$0xff]
    %v201 = vld [vmem:[#allocation8 + $0x40] sm:$0xff]
    %v202 = vld [vmem:[#allocation8 + $0x48] sm:$0xff]
    %v203 = vld [vmem:[#allocation8 + $0x50] sm:$0xff]
    %v204 = vld [vmem:[#allocation8 + $0x58] sm:$0xff]
    %v205 = vld [vmem:[#allocation8 + $0x60] sm:$0xff]
    %v206 = vld [vmem:[#allocation8 + $0x68] sm:$0xff]
    %v207 = vld [vmem:[#allocation8 + $0x70] sm:$0xff]
    %v208 = vld [vmem:[#allocation8 + $0x78] sm:$0xff]
    %v209 = vld [vmem:[#allocation8 + $0x80] sm:$0xff]
    %v210 = vld [vmem:[#allocation8 + $0x88] sm:$0xff]
    %v211 = vld [vmem:[#allocation8 + $0x90] sm:$0xff]
    %v212 = vld [vmem:[#allocation8 + $0x98] sm:$0xff]
    %v213 = vld [vmem:[#allocation8 + $0xa0] sm:$0xff]
    %v214 = vld [vmem:[#allocation8 + $0xa8] sm:$0xff]
    %v215 = vld [vmem:[#allocation8 + $0xb0] sm:$0xff]
    %v216 = vld [vmem:[#allocation8 + $0xb8] sm:$0xff]
    %v217 = vld [vmem:[#allocation8 + $0xc0] sm:$0xff]
    %v218 = vld [vmem:[#allocation8 + $0xc8] sm:$0xff]
    %v219 = vld [vmem:[#allocation8 + $0xd0] sm:$0xff]
    %v220 = vld [vmem:[#allocation8 + $0xd8] sm:$0xff]
    %v221 = vld [vmem:[#allocation8 + $0xe0] sm:$0xff]
    %v222 = vld [vmem:[#allocation8 + $0xe8] sm:$0xff]
    %v223 = vld [vmem:[#allocation8 + $0xf0] sm:$0xff]
    %v224 = vld [vmem:[#allocation8 + $0xf8] sm:$0xff]
    %v225 = vld [vmem:[#allocation8 + $0x100] sm:$0xff]
    %v226 = vld [vmem:[#allocation8 + $0x108] sm:$0xff]
    %v227 = vld [vmem:[#allocation8 + $0x110] sm:$0xff]
    %v228 = vld [vmem:[#allocation8 + $0x118] sm:$0xff]
    %v229 = vld [vmem:[#allocation8 + $0x120] sm:$0xff]
    %v230 = vld [vmem:[#allocation8 + $0x128] sm:$0xff]
    %v231 = vld [vmem:[#allocation8 + $0x130] sm:$0xff]
    %v232 = vld [vmem:[#allocation8 + $0x138] sm:$0xff]
    %v233 = vld [vmem:[#allocation8 + $0x140] sm:$0xff]
    %v234 = vld [vmem:[#allocation8 + $0x148] sm:$0xff]
    %v235 = vld [vmem:[#allocation8 + $0x150] sm:$0xff]
    %v236 = vld [vmem:[#allocation8 + $0x158] sm:$0xff]
    %v237 = vld [vmem:[#allocation8 + $0x160] sm:$0xff]
    %v238 = vld [vmem:[#allocation8 + $0x168] sm:$0xff]
    %v239 = vld [vmem:[#allocation8 + $0x170] sm:$0xff]
    %v240 = vld [vmem:[#allocation8 + $0x178] sm:$0xff]
    %v241 = vld [vmem:[#allocation8 + $0x180] sm:$0xff]
    %v242 = vld [vmem:[#allocation8 + $0x188] sm:$0xff]
    %v243 = vld [vmem:[#allocation8 + $0x190] sm:$0xff]
    %v244 = vld [vmem:[#allocation8 + $0x198] sm:$0xff]
    %v245 = vld [vmem:[#allocation8 + $0x1a0] sm:$0xff]
    %v246 = vld [vmem:[#allocation8 + $0x1a8] sm:$0xff]
    %v247 = vld [vmem:[#allocation8 + $0x1b0] sm:$0xff]
    %v248 = vld [vmem:[#allocation8 + $0x1b8] sm:$0xff]
    %v249 = vld [vmem:[#allocation8 + $0x1c0] sm:$0xff]
    %v250 = vld [vmem:[#allocation8 + $0x1c8] sm:$0xff]
    %v251 = vld [vmem:[#allocation8 + $0x1d0] sm:$0xff]
    %v252 = vld [vmem:[#allocation8 + $0x1d8] sm:$0xff]
    %v253 = vld [vmem:[#allocation8 + $0x1e0] sm:$0xff]
    %v254 = vld [vmem:[#allocation8 + $0x1e8] sm:$0xff]
    %v255 = vld [vmem:[#allocation8 + $0x1f0] sm:$0xff]
    %v256 = vld [vmem:[#allocation8 + $0x1f8] sm:$0xff]
    %v257 = vld [vmem:[#allocation8 + $0x200] sm:$0xff]
    %v258 = vld [vmem:[#allocation8 + $0x208] sm:$0xff]
    %v259 = vld [vmem:[#allocation8 + $0x210] sm:$0xff]
    %v260 = vld [vmem:[#allocation8 + $0x218] sm:$0xff]
    %v261 = vld [vmem:[#allocation8 + $0x220] sm:$0xff]
    %v262 = vld [vmem:[#allocation8 + $0x228] sm:$0xff]
    %v263 = vld [vmem:[#allocation8 + $0x230] sm:$0xff]
    %v264 = vld [vmem:[#allocation8 + $0x238] sm:$0xff]
    %v265 = vld [vmem:[#allocation8 + $0x240] sm:$0xff]
    %v266 = vld [vmem:[#allocation8 + $0x248] sm:$0xff]
    %v267 = vld [vmem:[#allocation8 + $0x250] sm:$0xff]
    %v268 = vld [vmem:[#allocation8 + $0x258] sm:$0xff]
    %v269 = vld [vmem:[#allocation8 + $0x260] sm:$0xff]
    %v270 = vld [vmem:[#allocation8 + $0x268] sm:$0xff]
    %v271 = vld [vmem:[#allocation8 + $0x270] sm:$0xff]
    %v272 = vld [vmem:[#allocation8 + $0x278] sm:$0xff]
    %v273 = vld [vmem:[#allocation8 + $0x280] sm:$0xff]
    %v274 = vld [vmem:[#allocation8 + $0x288] sm:$0xff]
    %v275 = vld [vmem:[#allocation8 + $0x290] sm:$0xff]
    %v276 = vld [vmem:[#allocation8 + $0x298] sm:$0xff]
    %v277 = vld [vmem:[#allocation8 + $0x2a0] sm:$0xff]
    %v278 = vld [vmem:[#allocation8 + $0x2a8] sm:$0xff]
    %v279 = vld [vmem:[#allocation8 + $0x2b0] sm:$0xff]
    %v280 = vld [vmem:[#allocation8 + $0x2b8] sm:$0xff]
    %v281 = vld [vmem:[#allocation8 + $0x2c0] sm:$0xff]
    %v282 = vld [vmem:[#allocation8 + $0x2c8] sm:$0xff]
    %v283 = vld [vmem:[#allocation8 + $0x2d0] sm:$0xff]
    %v284 = vld [vmem:[#allocation8 + $0x2d8] sm:$0xff]
    %v285 = vld [vmem:[#allocation8 + $0x2e0] sm:$0xff]
    %v286 = vld [vmem:[#allocation8 + $0x2e8] sm:$0xff]
    %v287 = vld [vmem:[#allocation8 + $0x2f0] sm:$0xff]
    %v288 = vld [vmem:[#allocation8 + $0x2f8] sm:$0xff]
    %v289 = vld [vmem:[#allocation8 + $0x300] sm:$0xff]
    %v290 = vld [vmem:[#allocation8 + $0x308] sm:$0xff]
    %v291 = vld [vmem:[#allocation8 + $0x310] sm:$0xff]
    %v292 = vld [vmem:[#allocation8 + $0x318] sm:$0xff]
    %v293 = vld [vmem:[#allocation8 + $0x320] sm:$0xff]
    %v294 = vld [vmem:[#allocation8 + $0x328] sm:$0xff]
    %v295 = vld [vmem:[#allocation8 + $0x330] sm:$0xff]
    %v296 = vld [vmem:[#allocation8 + $0x338] sm:$0xff]
    %v297 = vld [vmem:[#allocation8 + $0x340] sm:$0xff]
    %v298 = vld [vmem:[#allocation8 + $0x348] sm:$0xff]
    %v299 = vld [vmem:[#allocation8 + $0x350] sm:$0xff]
    %v300 = vld [vmem:[#allocation8 + $0x358] sm:$0xff]
    %v301 = vld [vmem:[#allocation8 + $0x360] sm:$0xff]
    %v302 = vld [vmem:[#allocation8 + $0x368] sm:$0xff]
    %v303 = vld [vmem:[#allocation8 + $0x370] sm:$0xff]
    %v304 = vld [vmem:[#allocation8 + $0x378] sm:$0xff]
    %v305 = vld [vmem:[#allocation8 + $0x380] sm:$0xff]
    %v306 = vld [vmem:[#allocation8 + $0x388] sm:$0xff]
    %v307 = vld [vmem:[#allocation8 + $0x390] sm:$0xff]
    %v308 = vld [vmem:[#allocation8 + $0x398] sm:$0xff]
    %v309 = vld [vmem:[#allocation8 + $0x3a0] sm:$0xff]
    %v310 = vld [vmem:[#allocation8 + $0x3a8] sm:$0xff]
    %v311 = vld [vmem:[#allocation8 + $0x3b0] sm:$0xff]
    %v312 = vld [vmem:[#allocation8 + $0x3b8] sm:$0xff]
    %v313 = vld [vmem:[#allocation8 + $0x3c0] sm:$0xff]
    %v314 = vld [vmem:[#allocation8 + $0x3c8] sm:$0xff]
    %v315 = vld [vmem:[#allocation8 + $0x3d0] sm:$0xff]
    %v316 = vld [vmem:[#allocation8 + $0x3d8] sm:$0xff]
    %v317 = vld [vmem:[#allocation8 + $0x3e0] sm:$0xff]
    %v318 = vld [vmem:[#allocation8 + $0x3e8] sm:$0xff]
    %v319 = vld [vmem:[#allocation8 + $0x3f0] sm:$0xff]
    %v320 = vld [vmem:[#allocation8 + $0x3f8] sm:$0xff]
    %v321 = vld [vmem:[#allocation8 + $0x400] sm:$0xff]
    %v322 = vld [vmem:[#allocation8 + $0x408] sm:$0xff]
    %v323 = vld [vmem:[#allocation8 + $0x410] sm:$0xff]
    %v324 = vld [vmem:[#allocation8 + $0x418] sm:$0xff]
    %v325 = vld [vmem:[#allocation8 + $0x420] sm:$0xff]
    %v326 = vld [vmem:[#allocation8 + $0x428] sm:$0xff]
    %v327 = vld [vmem:[#allocation8 + $0x430] sm:$0xff]
    %v328 = vld [vmem:[#allocation8 + $0x438] sm:$0xff]
    %v329 = vld [vmem:[#allocation8 + $0x440] sm:$0xff]
    %v330 = vld [vmem:[#allocation8 + $0x448] sm:$0xff]
    %v331 = vld [vmem:[#allocation8 + $0x450] sm:$0xff]
    %v332 = vld [vmem:[#allocation8 + $0x458] sm:$0xff]
    %v333 = vld [vmem:[#allocation8 + $0x460] sm:$0xff]
    %v334 = vld [vmem:[#allocation8 + $0x468] sm:$0xff]
    %v335 = vld [vmem:[#allocation8 + $0x470] sm:$0xff]
    %v336 = vld [vmem:[#allocation8 + $0x478] sm:$0xff]
    %v337 = vld [vmem:[#allocation8 + $0x480] sm:$0xff]
    %v338 = vld [vmem:[#allocation8 + $0x488] sm:$0xff]
    %v339 = vld [vmem:[#allocation8 + $0x490] sm:$0xff]
    %v340 = vld [vmem:[#allocation8 + $0x498] sm:$0xff]
    %v341 = vld [vmem:[#allocation8 + $0x4a0] sm:$0xff]
    %v342 = vld [vmem:[#allocation8 + $0x4a8] sm:$0xff]
    %v343 = vld [vmem:[#allocation8 + $0x4b0] sm:$0xff]
    %v344 = vld [vmem:[#allocation8 + $0x4b8] sm:$0xff]
    %v345 = vld [vmem:[#allocation8 + $0x4c0] sm:$0xff]
    %v346 = vld [vmem:[#allocation8 + $0x4c8] sm:$0xff]
    %v347 = vld [vmem:[#allocation8 + $0x4d0] sm:$0xff]
    %v348 = vld [vmem:[#allocation8 + $0x4d8] sm:$0xff]
    %v349 = vld [vmem:[#allocation8 + $0x4e0] sm:$0xff]
    %v350 = vld [vmem:[#allocation8 + $0x4e8] sm:$0xff]
    %v351 = vld [vmem:[#allocation8 + $0x4f0] sm:$0xff]
    %v352 = vld [vmem:[#allocation8 + $0x4f8] sm:$0xff]
    %v353 = vld [vmem:[#allocation8 + $0x500] sm:$0xff]
    %v354 = vld [vmem:[#allocation8 + $0x508] sm:$0xff]
    %v355 = vld [vmem:[#allocation8 + $0x510] sm:$0xff]
    %v356 = vld [vmem:[#allocation8 + $0x518] sm:$0xff]
    %v357 = vld [vmem:[#allocation8 + $0x520] sm:$0xff]
    %v358 = vld [vmem:[#allocation8 + $0x528] sm:$0xff]
    %v359 = vld [vmem:[#allocation8 + $0x530] sm:$0xff]
    %v360 = vld [vmem:[#allocation8 + $0x538] sm:$0xff]
    %v361 = vld [vmem:[#allocation8 + $0x540] sm:$0xff]
    %v362 = vld [vmem:[#allocation8 + $0x548] sm:$0xff]
    %v363 = vld [vmem:[#allocation8 + $0x550] sm:$0xff]
    %v364 = vld [vmem:[#allocation8 + $0x558] sm:$0xff]
    %v365 = vld [vmem:[#allocation8 + $0x560] sm:$0xff]
    %v366 = vld [vmem:[#allocation8 + $0x568] sm:$0xff]
    %v367 = vld [vmem:[#allocation8 + $0x570] sm:$0xff]
    %v368 = vld [vmem:[#allocation8 + $0x578] sm:$0xff]
    %v369 = vld [vmem:[#allocation8 + $0x580] sm:$0xff]
    %v370 = vld [vmem:[#allocation8 + $0x588] sm:$0xff]
    %v371 = vld [vmem:[#allocation8 + $0x590] sm:$0xff]
    %v372 = vld [vmem:[#allocation8 + $0x598] sm:$0xff]
    %v373 = vld [vmem:[#allocation8 + $0x5a0] sm:$0xff]
    %v374 = vld [vmem:[#allocation8 + $0x5a8] sm:$0xff]
    %v375 = vld [vmem:[#allocation8 + $0x5b0] sm:$0xff]
    %v376 = vld [vmem:[#allocation8 + $0x5b8] sm:$0xff]
    %v377 = vld [vmem:[#allocation8 + $0x5c0] sm:$0xff]
    %v378 = vld [vmem:[#allocation8 + $0x5c8] sm:$0xff]
    %v379 = vld [vmem:[#allocation8 + $0x5d0] sm:$0xff]
    %v380 = vld [vmem:[#allocation8 + $0x5d8] sm:$0xff]
    %v381 = vld [vmem:[#allocation8 + $0x5e0] sm:$0xff]
    %v382 = vld [vmem:[#allocation8 + $0x5e8] sm:$0xff]
    %v383 = vld [vmem:[#allocation8 + $0x5f0] sm:$0xff]
    %v384 = vld [vmem:[#allocation8 + $0x5f8] sm:$0xff]
    %v385 = vld [vmem:[#allocation8 + $0x600] sm:$0xff]
    %v386 = vld [vmem:[#allocation8 + $0x608] sm:$0xff]
    %v387 = vld [vmem:[#allocation8 + $0x610] sm:$0xff]
    %v388 = vld [vmem:[#allocation8 + $0x618] sm:$0xff]
    %v389 = vld [vmem:[#allocation8 + $0x620] sm:$0xff]
    %v390 = vld [vmem:[#allocation8 + $0x628] sm:$0xff]
    %v391 = vld [vmem:[#allocation8 + $0x630] sm:$0xff]
    %v392 = vld [vmem:[#allocation8 + $0x638] sm:$0xff]
    %v393 = vld [vmem:[#allocation8 + $0x640] sm:$0xff]
    %v394 = vld [vmem:[#allocation8 + $0x648] sm:$0xff]
    %v395 = vld [vmem:[#allocation8 + $0x650] sm:$0xff]
    %v396 = vld [vmem:[#allocation8 + $0x658] sm:$0xff]
    %v397 = vld [vmem:[#allocation8 + $0x660] sm:$0xff]
    %v398 = vld [vmem:[#allocation8 + $0x668] sm:$0xff]
    %v399 = vld [vmem:[#allocation8 + $0x670] sm:$0xff]
    %v400 = vld [vmem:[#allocation8 + $0x678] sm:$0xff]
    %v401 = vld [vmem:[#allocation8 + $0x680] sm:$0xff]
    %v402 = vld [vmem:[#allocation8 + $0x688] sm:$0xff]
    %v403 = vld [vmem:[#allocation8 + $0x690] sm:$0xff]
    %v404 = vld [vmem:[#allocation8 + $0x698] sm:$0xff]
    %v405 = vld [vmem:[#allocation8 + $0x6a0] sm:$0xff]
    %v406 = vld [vmem:[#allocation8 + $0x6a8] sm:$0xff]
    %v407 = vld [vmem:[#allocation8 + $0x6b0] sm:$0xff]
    %v408 = vld [vmem:[#allocation8 + $0x6b8] sm:$0xff]
    %v409 = vld [vmem:[#allocation8 + $0x6c0] sm:$0xff]
    %v410 = vld [vmem:[#allocation8 + $0x6c8] sm:$0xff]
    %v411 = vld [vmem:[#allocation8 + $0x6d0] sm:$0xff]
    %v412 = vld [vmem:[#allocation8 + $0x6d8] sm:$0xff]
    %v413 = vld [vmem:[#allocation8 + $0x6e0] sm:$0xff]
    %v414 = vld [vmem:[#allocation8 + $0x6e8] sm:$0xff]
    %v415 = vld [vmem:[#allocation8 + $0x6f0] sm:$0xff]
    %v416 = vld [vmem:[#allocation8 + $0x6f8] sm:$0xff]
    %v417 = vld [vmem:[#allocation8 + $0x700] sm:$0xff]
    %v418 = vld [vmem:[#allocation8 + $0x708] sm:$0xff]
    %v419 = vld [vmem:[#allocation8 + $0x710] sm:$0xff]
    %v420 = vld [vmem:[#allocation8 + $0x718] sm:$0xff]
    %v421 = vld [vmem:[#allocation8 + $0x720] sm:$0xff]
    %v422 = vld [vmem:[#allocation8 + $0x728] sm:$0xff]
    %v423 = vld [vmem:[#allocation8 + $0x730] sm:$0xff]
    %v424 = vld [vmem:[#allocation8 + $0x738] sm:$0xff]
    %v425 = vld [vmem:[#allocation8 + $0x740] sm:$0xff]
    %v426 = vld [vmem:[#allocation8 + $0x748] sm:$0xff]
    %v427 = vld [vmem:[#allocation8 + $0x750] sm:$0xff]
    %v428 = vld [vmem:[#allocation8 + $0x758] sm:$0xff]
    %v429 = vld [vmem:[#allocation8 + $0x760] sm:$0xff]
    %v430 = vld [vmem:[#allocation8 + $0x768] sm:$0xff]
    %v431 = vld [vmem:[#allocation8 + $0x770] sm:$0xff]
    %v432 = vld [vmem:[#allocation8 + $0x778] sm:$0xff]
    %v433 = vld [vmem:[#allocation8 + $0x780] sm:$0xff]
    %v434 = vld [vmem:[#allocation8 + $0x788] sm:$0xff]
    %v435 = vld [vmem:[#allocation8 + $0x790] sm:$0xff]
    %v436 = vld [vmem:[#allocation8 + $0x798] sm:$0xff]
    %v437 = vld [vmem:[#allocation8 + $0x7a0] sm:$0xff]
    %v438 = vld [vmem:[#allocation8 + $0x7a8] sm:$0xff]
    %v439 = vld [vmem:[#allocation8 + $0x7b0] sm:$0xff]
    %v440 = vld [vmem:[#allocation8 + $0x7b8] sm:$0xff]
    %v441 = vld [vmem:[#allocation8 + $0x7c0] sm:$0xff]
    %v442 = vld [vmem:[#allocation8 + $0x7c8] sm:$0xff]
    %v443 = vld [vmem:[#allocation8 + $0x7d0] sm:$0xff]
    %v444 = vld [vmem:[#allocation8 + $0x7d8] sm:$0xff]
    %v445 = vld [vmem:[#allocation8 + $0x7e0] sm:$0xff]
    %v446 = vld [vmem:[#allocation8 + $0x7e8] sm:$0xff]
    %v447 = vld [vmem:[#allocation8 + $0x7f0] sm:$0xff]
    %v448 = vld [vmem:[#allocation8 + $0x7f8] sm:$0xff]
    %v449 = vld [vmem:[%s4] sm:$0xf]
    %v451 = vlaneseq
    %v452 = vshrl.u32 %v451, 7
    %v453 = vsub.s32 0, %v452
    %v454 = vrot.slane %v449, %v453
    %v455 = vlaneseq
    %v456 = vshrl.u32 %v455, 7
    %v457 = vsub.s32 1, %v456
    %v458 = vrot.slane %v449, %v457
    %v459 = vlaneseq
    %v460 = vshrl.u32 %v459, 7
    %v461 = vsub.s32 2, %v460
    %v462 = vrot.slane %v449, %v461
    %v463 = vlaneseq
    %v464 = vshrl.u32 %v463, 7
    %v465 = vsub.s32 3, %v464
    %v466 = vrot.slane %v449, %v465
    %471 = vmatprep.subr.mxu0 %v254
    %472 = vmatpush1.msra.mxu0 %v253
    %473 = vmatprep.subr.mxu0 %v250
    %474 = vmatpush1.msra.mxu0 %v249
    %475 = vmatprep.subr.mxu0 %v246
    %476 = vmatpush1.msra.mxu0 %v245
    %477 = vmatprep.subr.mxu0 %v242
    %478 = vmatpush1.msra.mxu0 %v241
    %479 = vmatprep.subr.mxu0 %v238
    %480 = vmatpush1.msra.mxu0 %v237
    %481 = vmatprep.subr.mxu0 %v234
    %482 = vmatpush1.msra.mxu0 %v233
    %483 = vmatprep.subr.mxu0 %v230
    %484 = vmatpush1.msra.mxu0 %v229
    %485 = vmatprep.subr.mxu0 %v226
    %486 = vmatpush1.msra.mxu0 %v225
    %487 = vmatprep.subr.mxu0 %v222
    %488 = vmatpush1.msra.mxu0 %v221
    %489 = vmatprep.subr.mxu0 %v218
    %490 = vmatpush1.msra.mxu0 %v217
    %491 = vmatprep.subr.mxu0 %v214
    %492 = vmatpush1.msra.mxu0 %v213
    %493 = vmatprep.subr.mxu0 %v210
    %494 = vmatpush1.msra.mxu0 %v209
    %495 = vmatprep.subr.mxu0 %v206
    %496 = vmatpush1.msra.mxu0 %v205
    %497 = vmatprep.subr.mxu0 %v202
    %498 = vmatpush1.msra.mxu0 %v201
    %499 = vmatprep.subr.mxu0 %v198
    %500 = vmatpush1.msra.mxu0 %v197
    %501 = vmatprep.subr.mxu0 %v194
    %502 = vmatpush1.msra.mxu0 %v193
    %503 = vmatprep.subr.mxu0 %v318
    %504 = vmatpush2.msra.mxu0 %v317
    %505 = vmatprep.subr.mxu0 %v314
    %506 = vmatpush2.msra.mxu0 %v313
    %507 = vmatprep.subr.mxu0 %v310
    %508 = vmatpush2.msra.mxu0 %v309
    %509 = vmatprep.subr.mxu0 %v306
    %510 = vmatpush2.msra.mxu0 %v305
    %511 = vmatprep.subr.mxu0 %v302
    %512 = vmatpush2.msra.mxu0 %v301
    %513 = vmatprep.subr.mxu0 %v298
    %514 = vmatpush2.msra.mxu0 %v297
    %515 = vmatprep.subr.mxu0 %v294
    %516 = vmatpush2.msra.mxu0 %v293
    %517 = vmatprep.subr.mxu0 %v290
    %518 = vmatpush2.msra.mxu0 %v289
    %519 = vmatprep.subr.mxu0 %v286
    %520 = vmatpush2.msra.mxu0 %v285
    %521 = vmatprep.subr.mxu0 %v282
    %522 = vmatpush2.msra.mxu0 %v281
    %523 = vmatprep.subr.mxu0 %v278
    %524 = vmatpush2.msra.mxu0 %v277
    %525 = vmatprep.subr.mxu0 %v274
    %526 = vmatpush2.msra.mxu0 %v273
    %527 = vmatprep.subr.mxu0 %v270
    %528 = vmatpush2.msra.mxu0 %v269
    %529 = vmatprep.subr.mxu0 %v266
    %530 = vmatpush2.msra.mxu0 %v265
    %531 = vmatprep.subr.mxu0 %v262
    %532 = vmatpush2.msra.mxu0 %v261
    %533 = vmatprep.subr.mxu0 %v258
    %534 = vmatpush2.msra.mxu0 %v257
    %535 = vmatprep.mubr.f32.mxu0 %v186
    %536 = vmatmul.mubr.f32.gmra.mxu0 %v185
    %v537 = vpop.f32.mrf.mxu0
    %v538 = vadd.f32 %v454, %v537
    %v539 = vpop.f32.mrf.mxu0
    %v540 = vadd.f32 %v458, %v539
    %541 = vmatprep.mubr.f32.mxu0 %v190
    %542 = vmatmul.mubr.f32.gmra.mxu0 %v189
    %v543 = vpop.f32.mrf.mxu0
    %v544 = vadd.f32 %v454, %v543
    %v545 = vpop.f32.mrf.mxu0
    %v546 = vadd.f32 %v458, %v545
    %547 = vdwg.mxu0
    %548 = vmatprep.subr.mxu0 %v382
    %549 = vmatpush1.msra.mxu0 %v381
    %550 = vmatprep.subr.mxu0 %v378
    %551 = vmatpush1.msra.mxu0 %v377
    %552 = vmatprep.subr.mxu0 %v374
    %553 = vmatpush1.msra.mxu0 %v373
    %554 = vmatprep.subr.mxu0 %v370
    %555 = vmatpush1.msra.mxu0 %v369
    %556 = vmatprep.subr.mxu0 %v366
    %557 = vmatpush1.msra.mxu0 %v365
    %558 = vmatprep.subr.mxu0 %v362
    %559 = vmatpush1.msra.mxu0 %v361
    %560 = vmatprep.subr.mxu0 %v358
    %561 = vmatpush1.msra.mxu0 %v357
    %562 = vmatprep.subr.mxu0 %v354
    %563 = vmatpush1.msra.mxu0 %v353
    %564 = vmatprep.subr.mxu0 %v350
    %565 = vmatpush1.msra.mxu0 %v349
    %566 = vmatprep.subr.mxu0 %v346
    %567 = vmatpush1.msra.mxu0 %v345
    %568 = vmatprep.subr.mxu0 %v342
    %569 = vmatpush1.msra.mxu0 %v341
    %570 = vmatprep.subr.mxu0 %v338
    %571 = vmatpush1.msra.mxu0 %v337
    %572 = vmatprep.subr.mxu0 %v334
    %573 = vmatpush1.msra.mxu0 %v333
    %574 = vmatprep.subr.mxu0 %v330
    %575 = vmatpush1.msra.mxu0 %v329
    %576 = vmatprep.subr.mxu0 %v326
    %577 = vmatpush1.msra.mxu0 %v325
    %578 = vmatprep.subr.mxu0 %v322
    %579 = vmatpush1.msra.mxu0 %v321
    %580 = vmatprep.subr.mxu0 %v446
    %581 = vmatpush2.msra.mxu0 %v445
    %582 = vmatprep.subr.mxu0 %v442
    %583 = vmatpush2.msra.mxu0 %v441
    %584 = vmatprep.subr.mxu0 %v438
    %585 = vmatpush2.msra.mxu0 %v437
    %586 = vmatprep.subr.mxu0 %v434
    %587 = vmatpush2.msra.mxu0 %v433
    %588 = vmatprep.subr.mxu0 %v430
    %589 = vmatpush2.msra.mxu0 %v429
    %590 = vmatprep.subr.mxu0 %v426
    %591 = vmatpush2.msra.mxu0 %v425
    %592 = vmatprep.subr.mxu0 %v422
    %593 = vmatpush2.msra.mxu0 %v421
    %594 = vmatprep.subr.mxu0 %v418
    %595 = vmatpush2.msra.mxu0 %v417
    %596 = vmatprep.subr.mxu0 %v414
    %597 = vmatpush2.msra.mxu0 %v413
    %598 = vmatprep.subr.mxu0 %v410
    %599 = vmatpush2.msra.mxu0 %v409
    %600 = vmatprep.subr.mxu0 %v406
    %601 = vmatpush2.msra.mxu0 %v405
    %602 = vmatprep.subr.mxu0 %v402
    %603 = vmatpush2.msra.mxu0 %v401
    %604 = vmatprep.subr.mxu0 %v398
    %605 = vmatpush2.msra.mxu0 %v397
    %606 = vmatprep.subr.mxu0 %v394
    %607 = vmatpush2.msra.mxu0 %v393
    %608 = vmatprep.subr.mxu0 %v390
    %609 = vmatpush2.msra.mxu0 %v389
    %610 = vmatprep.subr.mxu0 %v386
    %611 = vmatpush2.msra.mxu0 %v385
    %612 = vmatprep.mubr.f32.mxu0 %v188
    %613 = vmatmul.mubr.f32.gmra.mxu0 %v187
    %v614 = vpop.f32.mrf.mxu0
    %v615 = vadd.f32 %v538, %v614
    %v616 = vpop.f32.mrf.mxu0
    %v617 = vadd.f32 %v540, %v616
    %618 = vmatprep.mubr.f32.mxu0 %v192
    %619 = vmatmul.mubr.f32.gmra.mxu0 %v191
    %v620 = vpop.f32.mrf.mxu0
    %v621 = vadd.f32 %v544, %v620
    %v622 = vpop.f32.mrf.mxu0
    %v623 = vadd.f32 %v546, %v622
    %624 = vdwg.mxu0
    %625 = vmatprep.subr.mxu0 %v256
    %626 = vmatpush1.msra.mxu0 %v255
    %627 = vmatprep.subr.mxu0 %v252
    %628 = vmatpush1.msra.mxu0 %v251
    %629 = vmatprep.subr.mxu0 %v248
    %630 = vmatpush1.msra.mxu0 %v247
    %631 = vmatprep.subr.mxu0 %v244
    %632 = vmatpush1.msra.mxu0 %v243
    %633 = vmatprep.subr.mxu0 %v240
    %634 = vmatpush1.msra.mxu0 %v239
    %635 = vmatprep.subr.mxu0 %v236
    %636 = vmatpush1.msra.mxu0 %v235
    %637 = vmatprep.subr.mxu0 %v232
    %638 = vmatpush1.msra.mxu0 %v231
    %639 = vmatprep.subr.mxu0 %v228
    %640 = vmatpush1.msra.mxu0 %v227
    %641 = vmatprep.subr.mxu0 %v224
    %642 = vmatpush1.msra.mxu0 %v223
    %643 = vmatprep.subr.mxu0 %v220
    %644 = vmatpush1.msra.mxu0 %v219
    %645 = vmatprep.subr.mxu0 %v216
    %646 = vmatpush1.msra.mxu0 %v215
    %647 = vmatprep.subr.mxu0 %v212
    %648 = vmatpush1.msra.mxu0 %v211
    %649 = vmatprep.subr.mxu0 %v208
    %650 = vmatpush1.msra.mxu0 %v207
    %651 = vmatprep.subr.mxu0 %v204
    %652 = vmatpush1.msra.mxu0 %v203
    %653 = vmatprep.subr.mxu0 %v200
    %654 = vmatpush1.msra.mxu0 %v199
    %655 = vmatprep.subr.mxu0 %v196
    %656 = vmatpush1.msra.mxu0 %v195
    %657 = vmatprep.subr.mxu0 %v320
    %658 = vmatpush2.msra.mxu0 %v319
    %659 = vmatprep.subr.mxu0 %v316
    %660 = vmatpush2.msra.mxu0 %v315
    %661 = vmatprep.subr.mxu0 %v312
    %662 = vmatpush2.msra.mxu0 %v311
    %663 = vmatprep.subr.mxu0 %v308
    %664 = vmatpush2.msra.mxu0 %v307
    %665 = vmatprep.subr.mxu0 %v304
    %666 = vmatpush2.msra.mxu0 %v303
    %667 = vmatprep.subr.mxu0 %v300
    %668 = vmatpush2.msra.mxu0 %v299
    %669 = vmatprep.subr.mxu0 %v296
    %670 = vmatpush2.msra.mxu0 %v295
    %671 = vmatprep.subr.mxu0 %v292
    %672 = vmatpush2.msra.mxu0 %v291
    %673 = vmatprep.subr.mxu0 %v288
    %674 = vmatpush2.msra.mxu0 %v287
    %675 = vmatprep.subr.mxu0 %v284
    %676 = vmatpush2.msra.mxu0 %v283
    %677 = vmatprep.subr.mxu0 %v280
    %678 = vmatpush2.msra.mxu0 %v279
    %679 = vmatprep.subr.mxu0 %v276
    %680 = vmatpush2.msra.mxu0 %v275
    %681 = vmatprep.subr.mxu0 %v272
    %682 = vmatpush2.msra.mxu0 %v271
    %683 = vmatprep.subr.mxu0 %v268
    %684 = vmatpush2.msra.mxu0 %v267
    %685 = vmatprep.subr.mxu0 %v264
    %686 = vmatpush2.msra.mxu0 %v263
    %687 = vmatprep.subr.mxu0 %v260
    %688 = vmatpush2.msra.mxu0 %v259
    %689 = vmatprep.mubr.f32.mxu0 %v186
    %690 = vmatmul.mubr.f32.gmra.mxu0 %v185
    %v691 = vpop.f32.mrf.mxu0
    %v692 = vadd.f32 %v462, %v691
    %v693 = vpop.f32.mrf.mxu0
    %v694 = vadd.f32 %v466, %v693
    %695 = vmatprep.mubr.f32.mxu0 %v190
    %696 = vmatmul.mubr.f32.gmra.mxu0 %v189
    %v697 = vpop.f32.mrf.mxu0
    %v698 = vadd.f32 %v462, %v697
    %v699 = vpop.f32.mrf.mxu0
    %v700 = vadd.f32 %v466, %v699
    %701 = vdwg.mxu0
    %702 = vmatprep.subr.mxu0 %v384
    %703 = vmatpush1.msra.mxu0 %v383
    %704 = vmatprep.subr.mxu0 %v380
    %705 = vmatpush1.msra.mxu0 %v379
    %706 = vmatprep.subr.mxu0 %v376
    %707 = vmatpush1.msra.mxu0 %v375
    %708 = vmatprep.subr.mxu0 %v372
    %709 = vmatpush1.msra.mxu0 %v371
    %710 = vmatprep.subr.mxu0 %v368
    %711 = vmatpush1.msra.mxu0 %v367
    %712 = vmatprep.subr.mxu0 %v364
    %713 = vmatpush1.msra.mxu0 %v363
    %714 = vmatprep.subr.mxu0 %v360
    %715 = vmatpush1.msra.mxu0 %v359
    %716 = vmatprep.subr.mxu0 %v356
    %717 = vmatpush1.msra.mxu0 %v355
    %718 = vmatprep.subr.mxu0 %v352
    %719 = vmatpush1.msra.mxu0 %v351
    %720 = vmatprep.subr.mxu0 %v348
    %721 = vmatpush1.msra.mxu0 %v347
    %722 = vmatprep.subr.mxu0 %v344
    %723 = vmatpush1.msra.mxu0 %v343
    %724 = vmatprep.subr.mxu0 %v340
    %725 = vmatpush1.msra.mxu0 %v339
    %726 = vmatprep.subr.mxu0 %v336
    %727 = vmatpush1.msra.mxu0 %v335
    %728 = vmatprep.subr.mxu0 %v332
    %729 = vmatpush1.msra.mxu0 %v331
    %730 = vmatprep.subr.mxu0 %v328
    %731 = vmatpush1.msra.mxu0 %v327
    %732 = vmatprep.subr.mxu0 %v324
    %733 = vmatpush1.msra.mxu0 %v323
    %734 = vmatprep.subr.mxu0 %v448
    %735 = vmatpush2.msra.mxu0 %v447
    %736 = vmatprep.subr.mxu0 %v444
    %737 = vmatpush2.msra.mxu0 %v443
    %738 = vmatprep.subr.mxu0 %v440
    %739 = vmatpush2.msra.mxu0 %v439
    %740 = vmatprep.subr.mxu0 %v436
    %741 = vmatpush2.msra.mxu0 %v435
    %742 = vmatprep.subr.mxu0 %v432
    %743 = vmatpush2.msra.mxu0 %v431
    %744 = vmatprep.subr.mxu0 %v428
    %745 = vmatpush2.msra.mxu0 %v427
    %746 = vmatprep.subr.mxu0 %v424
    %747 = vmatpush2.msra.mxu0 %v423
    %748 = vmatprep.subr.mxu0 %v420
    %749 = vmatpush2.msra.mxu0 %v419
    %750 = vmatprep.subr.mxu0 %v416
    %751 = vmatpush2.msra.mxu0 %v415
    %752 = vmatprep.subr.mxu0 %v412
    %753 = vmatpush2.msra.mxu0 %v411
    %754 = vmatprep.subr.mxu0 %v408
    %755 = vmatpush2.msra.mxu0 %v407
    %756 = vmatprep.subr.mxu0 %v404
    %757 = vmatpush2.msra.mxu0 %v403
    %758 = vmatprep.subr.mxu0 %v400
    %759 = vmatpush2.msra.mxu0 %v399
    %760 = vmatprep.subr.mxu0 %v396
    %761 = vmatpush2.msra.mxu0 %v395
    %762 = vmatprep.subr.mxu0 %v392
    %763 = vmatpush2.msra.mxu0 %v391
    %764 = vmatprep.subr.mxu0 %v388
    %765 = vmatpush2.msra.mxu0 %v387
    %766 = vmatprep.mubr.f32.mxu0 %v188
    %767 = vmatmul.mubr.f32.gmra.mxu0 %v187
    %v768 = vpop.f32.mrf.mxu0
    %v769 = vadd.f32 %v692, %v768
    %v770 = vpop.f32.mrf.mxu0
    %v771 = vadd.f32 %v694, %v770
    %772 = vmatprep.mubr.f32.mxu0 %v192
    %773 = vmatmul.mubr.f32.gmra.mxu0 %v191
    %v774 = vpop.f32.mrf.mxu0
    %v775 = vadd.f32 %v698, %v774
    %v776 = vpop.f32.mrf.mxu0
    %v777 = vadd.f32 %v700, %v776
    %778 = vdwg.mxu0
    %779 = vst [vmem:[#allocation10] sm:$0xff] %v615
    %780 = vst [vmem:[#allocation10 + $0x8] sm:$0xff] %v617
    %781 = vst [vmem:[#allocation10 + $0x10] sm:$0xff] %v769
    %782 = vst [vmem:[#allocation10 + $0x18] sm:$0xff] %v771
    %783 = vst [vmem:[#allocation10 + $0x20] sm:$0xff] %v621
    %784 = vst [vmem:[#allocation10 + $0x28] sm:$0xff] %v623
    %785 = vst [vmem:[#allocation10 + $0x30] sm:$0xff] %v775
    %786 = vst [vmem:[#allocation10 + $0x38] sm:$0xff] %v777
    // Predicated region
    $region38: #{tpu_custom_call.1} parent=1 // pred_check
      _
    $region39: #{tpu_custom_call.1} parent=1 // pred_check_branch
      %788 = sbr.rel (0) target = $region41
    $region40: #{tpu_custom_call.1} parent=1 // pred_region
      %s790 = ssub.s32 1024, 1024
      %791 = vsyncadd [#allocation4], %s790
      %s792 = sshll.u32 [#allocation10], 4
      %s793 = int_to_ptr.vmem [resolvable:$true] %s792
      %798 = dma.vmem_to_hbm [thread:$0]  %s793, 1024, %s5, [#allocation4], 512, 512, 32
    $region41: #{tpu_custom_call.1} parent=1 // pred_fallthru
      _
    // Predicated region
    $region42: #{tpu_custom_call.1} parent=1 // pred_check
      _
    $region43: #{tpu_custom_call.1} parent=1 // pred_check_branch
      %800 = sbr.rel (0) target = $region45
    $region44: #{tpu_custom_call.1} parent=1 // pred_region
      %801 = dma.done [#allocation4], 1024
    $region45: #{tpu_custom_call.1} parent=1 // pred_fallthru
      _
    %802 = vsyncpa [#allocation3], 1
    %803 = vsyncpa [#allocation6], 1
    %804 = vsyncpa [#allocation9], 1
    %805 = vsyncpa [#allocation4], 1

</llo_original>
